<compile_context>
chip_gen: v6e
topology: v6e:2x2x1
jax: 0.10.0
libtpu: 0.0.40
codegen_flags: <defaults>
</compile_context>

<pallas_src>
import functools
import math

import jax
import jax.numpy as jnp
from jax.experimental import pallas as pl
from jax.experimental.pallas import tpu as pltpu


def _lcm(a, b):
    return a * b // math.gcd(a, b)


def _posenc_kernel(x_ref, pe_ref, o_ref, *, reps):
    # x_ref/o_ref: (tR, tW); pe_ref: (tR, Pw) with tW == reps * Pw and the pe
    # lane pattern periodic with period Pw, so replication is whole-vreg copies.
    pe = pe_ref[...]
    if reps > 1:
        pe = jnp.tile(pe, (1, reps))
    o_ref[...] = x_ref[...] + pe


def make_positional_encoding(d_model, max_len=300, dtype=jnp.float32):
    """Builds the pe table like the PyTorch __init__, squeezed to (max_len, d_model)."""
    position = jnp.arange(max_len, dtype=jnp.float32)[:, None]            # (max_len, 1)
    div_term = jnp.exp(
        jnp.arange(0, d_model, 2, dtype=jnp.float32)
        * (-math.log(10000.0) / d_model)
    )                                                                     # (ceil(D/2),)
    angles = position * div_term                                          # (max_len, ceil(D/2))
    n_sin = (d_model + 1) // 2
    n_cos = d_model // 2
    pe = jnp.zeros((max_len, d_model), dtype=jnp.float32)
    pe = pe.at[:, 0::2].set(jnp.sin(angles)[:, :n_sin])
    pe = pe.at[:, 1::2].set(jnp.cos(angles)[:, :n_cos])
    return pe.astype(dtype)


_TARGET_BLOCK_BYTES = 6 << 20     # 4-8 MiB x blocks: near HBM roofline on v5e/v6e/v7x
_VMEM_CAP_BYTES = 44 << 20        # healthy headroom under v7x's 64 MiB physical VMEM
_GROUPED_PE_MAX_BYTES = 8 << 20   # gate for the row-grouped (pre-broadcast pe) fold


def positional_encoding_forward(x, pe, dropout=0.0, train=False):
    """x: (S, B, D); pe: (max_len, D). Returns dropout(x + pe[:S], p, train)."""
    if train and dropout > 0.0:
        # TODO(synk): fuse stochastic dropout via pltpu.prng_seed / prng_random_bits.
        raise NotImplementedError("dropout with train=True and p>0 is not implemented")

    S, B, D = x.shape
    BD = B * D
    itemsize = jnp.dtype(x.dtype).itemsize
    pack = {1: 32, 2: 16, 4: 8}.get(itemsize, 8)   # sublane packing (rows) per dtype
    pe_s = pe[:S].astype(x.dtype)                  # (S, D); cast exactly once here

    # ---- choose the 2-D fold (R, W) and the per-row pe lane period -------------
    use_grouped = False
    g = 1
    if BD % 128 != 0:
        g = 128 // math.gcd(BD, 128)
        use_grouped = (S % g == 0) and (S * BD * itemsize <= _GROUPED_PE_MAX_BYTES)

    if use_grouped:
        # Group g consecutive seq rows per folded row so W = g*B*D is a multiple of
        # 128 lanes (unmasked vst).  pe then carries the full folded-row pattern
        # (g distinct pe rows, each repeated B times).  That doubles pe traffic,
        # so this path is gated to small tensors where lane-dense stores dominate.
        R, W = S // g, g * BD
        pe_p = jnp.broadcast_to(pe_s[:, None, :], (S, B, D)).reshape(R, W)
        lane_unit = W
    else:
        # Row-major (S, B*D) fold.  pe lane pattern has period D; pre-tile it to one
        # full lane period lcm(D, 128) so in-kernel replication is whole-vreg copies
        # (no per-vreg XLU shuffles) without pre-broadcasting to B*D width.
        R, W = S, BD
        L = _lcm(D, 128)
        if L <= W:
            lane_unit = L
            pe_p = jnp.tile(pe_s, (1, L // D)) if L > D else pe_s
        else:
            lane_unit = W
            pe_p = pe_s
    x2 = x.reshape(R, W)
    Pw = pe_p.shape[1]

    # ---- tile sizes: ~6 MiB x blocks; lane tiles are multiples of lane_unit -----
    min_rows = min(R, pack)
    if lane_unit < W:
        tW = (W // lane_unit) * lane_unit
        if min_rows * tW * itemsize > _TARGET_BLOCK_BYTES:
            units = max(1, _TARGET_BLOCK_BYTES // (min_rows * lane_unit * itemsize))
            tW = min(tW, units * lane_unit)
    else:
        tW = W
    rows = max(1, _TARGET_BLOCK_BYTES // (tW * itemsize))
    if rows >= R:
        tR = R
    else:
        tR = max(pack, (rows // pack) * pack)
        tR = min(tR, R)

    # ---- give non-trivial problems >=2 grid steps (v7x has 2 TensorCores) -------
    if pl.cdiv(R, tR) * pl.cdiv(W, tW) == 1:
        if R >= 2 * pack:
            tR = (((R + 1) // 2 + pack - 1) // pack) * pack
        elif lane_unit < W and tW >= 2 * lane_unit:
            tW = ((tW // lane_unit + 1) // 2) * lane_unit

    reps = tW // Pw
    grid = (pl.cdiv(R, tR), pl.cdiv(W, tW))

    # ---- VMEM limit from the real footprint: 2x(in) + 2x(out) + 2x(pe) + margin -
    need = (4 * tR * tW + 2 * tR * Pw) * itemsize + (2 << 20)
    vmem_limit = int(min(max(need, 16 << 20), _VMEM_CAP_BYTES))

    cost = pl.CostEstimate(
        flops=R * W,
        transcendentals=0,
        bytes_accessed=(2 * R * W + R * Pw) * itemsize,
    )

    out2 = pl.pallas_call(
        functools.partial(_posenc_kernel, reps=reps),
        out_shape=jax.ShapeDtypeStruct((R, W), x.dtype),
        grid_spec=pl.GridSpec(
            grid=grid,
            in_specs=[
                pl.BlockSpec((tR, tW), lambda i, j: (i, j)),
                pl.BlockSpec((tR, Pw), lambda i, j: (i, 0)),
            ],
            out_specs=pl.BlockSpec((tR, tW), lambda i, j: (i, j)),
        ),
        compiler_params=pltpu.CompilerParams(
            dimension_semantics=("parallel", "parallel"),
            vmem_limit_bytes=vmem_limit,
        ),
        cost_estimate=cost,
    )(x2, pe_p)

    return out2.reshape(S, B, D)


if __name__ == "__main__":
    key = jax.random.PRNGKey(0)
    k1, k2 = jax.random.split(key)

    pe = make_positional_encoding(d_model=32, max_len=300, dtype=jnp.float32)

    # Demo shapes from the module: seq=8, batch=2, d_model=32 (B*D=64 -> grouped fold).
    S, B, D = 8, 2, 32
    x = jax.random.normal(k1, (S, B, D), dtype=jnp.float32)
    out = jax.block_until_ready(positional_encoding_forward(x, pe, dropout=0.0, train=False))
    ref = x + pe[:S][:, None, :]
    assert out.shape == (S, B, D)
    assert jnp.allclose(out, ref, atol=1e-6), "mismatch vs reference (grouped fold)"

    # Second small check exercising the lane-dense (S, B*D) fold with in-kernel pe
    # replication (B*D = 256 -> two 128-lane periods per row, 2 row grid steps).
    S2, B2, D2 = 16, 8, 32
    x_b = jax.random.normal(k2, (S2, B2, D2), dtype=jnp.float32)
    out_b = jax.block_until_ready(positional_encoding_forward(x_b, pe))
    ref_b = x_b + pe[:S2][:, None, :]
    assert jnp.allclose(out_b, ref_b, atol=1e-6), "mismatch vs reference (lane-period fold)"

    print("KERNEL_OK")
</pallas_src>

<mosaic_0001>
module attributes {stable_mosaic.version = 11 : i64} {
  func.func @_posenc_kernel(%arg0: i32, %arg1: i32, %arg2: memref<4x128xf32, #tpu.memory_space<vmem>>, %arg3: memref<4x128xf32, #tpu.memory_space<vmem>>, %arg4: memref<4x128xf32, #tpu.memory_space<vmem>>) attributes {dimension_semantics = [#tpu.dimension_semantics<parallel>, #tpu.dimension_semantics<parallel>], iteration_bounds = array<i64: 1, 1>, scalar_prefetch = 0 : i64, scratch_operands = 0 : i64, tpu.core_type = #tpu.core_type<tc>, window_params = [{transform_indices = @transform_0, window_bounds = array<i64: 4, 128>}, {transform_indices = @transform_1, window_bounds = array<i64: 4, 128>}, {transform_indices = @transform_2, window_bounds = array<i64: 4, 128>}]} {
    %c0 = arith.constant 0 : index
    %c0_0 = arith.constant 0 : index
    %0 = vector.load %arg3[%c0, %c0_0] : memref<4x128xf32, #tpu.memory_space<vmem>>, vector<4x128xf32>
    %c0_1 = arith.constant 0 : index
    %c0_2 = arith.constant 0 : index
    %1 = vector.load %arg2[%c0_1, %c0_2] : memref<4x128xf32, #tpu.memory_space<vmem>>, vector<4x128xf32>
    %2 = arith.addf %1, %0 : vector<4x128xf32>
    %c0_3 = arith.constant 0 : index
    %c0_4 = arith.constant 0 : index
    %3 = vector.load %arg4[%c0_3, %c0_4] : memref<4x128xf32, #tpu.memory_space<vmem>>, vector<4x128xf32>
    tpu.vector_store %arg4[%c0_3, %c0_4], %2 {strides = array<i32>} : memref<4x128xf32, #tpu.memory_space<vmem>>, vector<4x128xf32>,
    return
  }
  func.func @transform_0(%arg0: i32, %arg1: i32) -> (i32, i32) {
    %c0_i32 = arith.constant 0 : i32
    return %arg0, %arg1 : i32, i32
  }
  func.func @transform_1(%arg0: i32, %arg1: i32) -> (i32, i32) {
    %c0_i32 = arith.constant 0 : i32
    %c0_i32_0 = arith.constant 0 : i32
    return %arg0, %c0_i32 : i32, i32
  }
  func.func @transform_2(%arg0: i32, %arg1: i32) -> (i32, i32) {
    %c0_i32 = arith.constant 0 : i32
    return %arg0, %arg1 : i32, i32
  }
}

</mosaic_0001>

<llo_original>
// kernel: tpu_custom_call.1
$region0: #{tpu_custom_call.1}
  #allocation0 [shape = 'u32[]', space=smem, size = 0x4, offset = 0x4, fixed_abs, tag = 'smem constant byte address 0x4 - core index']
  #allocation1 [shape = 'u32[144,128]{1,0:T(1,128)}', space=vmem, size = 0x12000, scoped, tag = 'internal scratch']
  %s0 = inlined_call_operand.hbm [shape: f32[4,128], index: 0, kind: input, shape index: {}]
  %s1 = inlined_call_operand.hbm [shape: f32[4,128], index: 1, kind: input, shape index: {}]
  %s2 = inlined_call_operand.hbm [shape: f32[4,128], index: 2, kind: output, shape index: {}]
  %s3 = sld [smem:[#allocation0]]
  $region26: #{tpu_custom_call.1} parent=0
    _
  %s5 = ssub.s32 1, %s3
  %s6 = scalar_select 0, %s5, %s3
  $region1: #{tpu_custom_call.1} parent=0
    #allocation2 [shape = 'u8[2048]{0}', space=vmem, size = 0x800, scoped, tag = 'input window, operand 0, single buffered']
    #allocation3 [shape = 's32[1]{0}', space=sflag, size = 0x4, scoped, tag = 'scoped memory for tpu_custom_call.1']
    #allocation4 [shape = 's32[1]{0}', space=sflag, size = 0x4, scoped, tag = 'scoped memory for tpu_custom_call.1']
    #allocation5 [shape = 'u8[2048]{0}', space=vmem, size = 0x800, scoped, tag = 'input window, operand 1, single buffered']
    #allocation6 [shape = 's32[1]{0}', space=sflag, size = 0x4, scoped, tag = 'scoped memory for tpu_custom_call.1']
    #allocation7 [shape = 'u8[2048]{0}', space=vmem, size = 0x800, scoped, tag = 'output window, operand 0, single buffered']
    %7 = vsyncpa [#allocation3], 0
    %8 = vsyncpa [#allocation6], 0
    %9 = vsyncpa [#allocation4], 0
    // Predicated region
    $region2: #{tpu_custom_call.1} parent=1 // pred_check
      _
    $region3: #{tpu_custom_call.1} parent=1 // pred_check_branch
      %11 = sbr.rel (0) target = $region5
    $region4: #{tpu_custom_call.1} parent=1 // pred_region
      %s13 = ssub.s32 64, 64
      %14 = vsyncadd [#allocation3], %s13
      %s16 = sshll.u32 [#allocation2], 4
      %s17 = int_to_ptr.vmem [resolvable:$true] %s16
      %19 = dma.hbm_to_vmem [thread:$0]  %s0, 64, %s17, [#allocation3]
    $region5: #{tpu_custom_call.1} parent=1 // pred_fallthru
      _
    // Predicated region
    $region6: #{tpu_custom_call.1} parent=1 // pred_check
      _
    $region7: #{tpu_custom_call.1} parent=1 // pred_check_branch
      %21 = sbr.rel (0) target = $region9
    $region8: #{tpu_custom_call.1} parent=1 // pred_region
      %s23 = ssub.s32 64, 64
      %24 = vsyncadd [#allocation6], %s23
      %s26 = sshll.u32 [#allocation5], 4
      %s27 = int_to_ptr.vmem [resolvable:$true] %s26
      %29 = dma.hbm_to_vmem [thread:$0]  %s1, 64, %s27, [#allocation6]
    $region9: #{tpu_custom_call.1} parent=1 // pred_fallthru
      _
    // Predicated region
    $region10: #{tpu_custom_call.1} parent=1 // pred_check
      _
    $region11: #{tpu_custom_call.1} parent=1 // pred_check_branch
      %31 = sbr.rel (0) target = $region13
    $region12: #{tpu_custom_call.1} parent=1 // pred_region
      %32 = dma.done [#allocation3], 64
    $region13: #{tpu_custom_call.1} parent=1 // pred_fallthru
      _
    // Predicated region
    $region14: #{tpu_custom_call.1} parent=1 // pred_check
      _
    $region15: #{tpu_custom_call.1} parent=1 // pred_check_branch
      %34 = sbr.rel (0) target = $region17
    $region16: #{tpu_custom_call.1} parent=1 // pred_region
      %35 = dma.done [#allocation6], 64
    $region17: #{tpu_custom_call.1} parent=1 // pred_fallthru
      _
    %v36 = vld [vmem:[#allocation5] sm:$0xf]
    %v37 = vld [vmem:[#allocation2] sm:$0xf]
    %v38 = vadd.f32 %v37, %v36
    %39 = vst [vmem:[#allocation7] sm:$0xf] %v38
    // Predicated region
    $region18: #{tpu_custom_call.1} parent=1 // pred_check
      _
    $region19: #{tpu_custom_call.1} parent=1 // pred_check_branch
      %41 = sbr.rel (0) target = $region21
    $region20: #{tpu_custom_call.1} parent=1 // pred_region
      %s43 = ssub.s32 64, 64
      %44 = vsyncadd [#allocation4], %s43
      %s46 = sshll.u32 [#allocation7], 4
      %s47 = int_to_ptr.vmem [resolvable:$true] %s46
      %49 = dma.vmem_to_hbm [thread:$0]  %s47, 64, %s2, [#allocation4]
    $region21: #{tpu_custom_call.1} parent=1 // pred_fallthru
      _
    // Predicated region
    $region22: #{tpu_custom_call.1} parent=1 // pred_check
      _
    $region23: #{tpu_custom_call.1} parent=1 // pred_check_branch
      %51 = sbr.rel (0) target = $region25
    $region24: #{tpu_custom_call.1} parent=1 // pred_region
      %52 = dma.done [#allocation4], 64
    $region25: #{tpu_custom_call.1} parent=1 // pred_fallthru
      _
    %53 = vsyncpa [#allocation3], 1
    %54 = vsyncpa [#allocation6], 1
    %55 = vsyncpa [#allocation4], 1

</llo_original>
